<compile_context>
chip_gen: v7x
topology: tpu7x:2x2x1
jax: 0.10.0
libtpu: 0.0.40
codegen_flags: <defaults>
</compile_context>

<pallas_src>
import numpy as np
import jax
import jax.numpy as jnp
from jax import lax
from jax.experimental import pallas as pl
from jax.experimental.pallas import tpu as pltpu


def calc_coeff(iter_num, high=1.0, low=0.0, alpha=10.0, max_iter=10000.0):
    # Forward-pass scalar used only by the (backward-only) GRL hook.
    return float(2.0 * (high - low) / (1.0 + np.exp(-alpha * iter_num / max_iter))
                 - (high - low) + low)


# ---------------------------------------------------------------------------
# Kernel
# ---------------------------------------------------------------------------
def adversarial_net_kernel(x_ref, wf_ref, w1_ref, w2_ref, out_ref):
    """Fused forward for one batch tile.

    x_ref   : (tile, in_feature)
    wf_ref  : (in_feature + 1, hf)       rows [:in_f] = Wf, row [in_f] = bf
    w1_ref  : (hf + 1, hl + hd)          rows [:hf]   = [Wl1 | Wd1], row [hf] = [bl1 | bd1]
    w2_ref  : (2, hl + hd + 1)           block-diag [Wl2ᵀ 0 ; 0 Wd2ᵀ], last col = [bl2 ; bd2]
    out_ref : (2, tile)                  row 0 = label pred, row 1 = domain pred
    """
    x = x_ref[...]                                   # (tile, in_f)
    in_f = x.shape[1]

    # --- features: Linear + ReLU ---
    wf = wf_ref[...]
    h = jnp.dot(x, wf[:in_f, :], preferred_element_type=jnp.float32) + wf[in_f:, :]
    h = jnp.maximum(h, 0.0)                          # (tile, hf)

    # --- fused hidden layers of both heads: Linear + ReLU ---
    w1 = w1_ref[...]
    hf = h.shape[1]
    hc = jnp.dot(h, w1[:hf, :], preferred_element_type=jnp.float32) + w1[hf:, :]
    hc = jnp.maximum(hc, 0.0)                        # (tile, hl+hd)

    # --- fused output layers (block-diagonal) + Sigmoid, emitted as (2, tile)
    #     so the store is lane-dense (batch on the lane axis). dot_general with
    #     both contracting dims last == matmul with trans_b -> MXU. ---
    w2 = w2_ref[...]
    hcat = hc.shape[1]
    logits = lax.dot_general(
        w2[:, :hcat], hc,
        dimension_numbers=(((1,), (1,)), ((), ())),
        preferred_element_type=jnp.float32) + w2[:, hcat:]
    out_ref[...] = jax.nn.sigmoid(logits).astype(out_ref.dtype)


# ---------------------------------------------------------------------------
# Wrapper
# ---------------------------------------------------------------------------
def _pick_batch_tile(B, max_tile=4096):
    """Largest lane-dense (multiple-of-128) divisor of B, preferring >=2 grid
    steps (so v7x can shard the batch across both TensorCores). Falls back to
    the full batch (grid of 1) when B is not 128-friendly."""
    best = None
    t = 128
    while t <= min(B, max_tile):
        if B % t == 0:
            if B // t >= 2:
                best = t              # keep the largest tile that still gives >=2 steps
            elif best is None:
                best = t
        t += 128
    return best if best is not None else B


def pack_params(params):
    """Pack the 10 PyTorch-layout params into 3 fused arrays for the kernel."""
    wf, bf, wl1, bl1, wl2, bl2, wd1, bd1, wd2, bd2 = params
    hl = wl1.shape[1]
    hd = wd1.shape[1]

    wf_aug = jnp.concatenate([wf, bf], axis=0)                       # (in_f+1, hf)

    w1cat = jnp.concatenate([wl1, wd1], axis=1)                      # (hf, hl+hd)
    b1cat = jnp.concatenate([bl1, bd1], axis=1)                      # (1,  hl+hd)
    w1_aug = jnp.concatenate([w1cat, b1cat], axis=0)                 # (hf+1, hl+hd)

    row_l = jnp.concatenate([wl2.T, jnp.zeros((1, hd), jnp.float32)], axis=1)
    row_d = jnp.concatenate([jnp.zeros((1, hl), jnp.float32), wd2.T], axis=1)
    w2t = jnp.concatenate([row_l, row_d], axis=0)                    # (2, hl+hd)
    b2 = jnp.concatenate([bl2, bd2], axis=0)                         # (2, 1)
    w2_aug = jnp.concatenate([w2t, b2], axis=1)                      # (2, hl+hd+1)

    return wf_aug, w1_aug, w2_aug


def adversarial_net_forward(x, params, *, batch_tile=None):
    """Tiles over the batch; fused weights stay VMEM-resident across the grid."""
    B, in_feature = x.shape
    if batch_tile is None:
        batch_tile = _pick_batch_tile(B)
    assert B % batch_tile == 0, "batch must be divisible by batch_tile"

    wf_aug, w1_aug, w2_aug = pack_params(params)
    hf = wf_aug.shape[1]
    hcat = w1_aug.shape[1]

    def rep_spec(arr):
        # Full-array block, same block index every grid step -> fetched once.
        return pl.BlockSpec(arr.shape, lambda i: (0, 0))

    x_spec = pl.BlockSpec((batch_tile, in_feature), lambda i: (i, 0))
    out_spec = pl.BlockSpec((2, batch_tile), lambda i: (0, i))

    grid = (B // batch_tile,)

    # Advisory cost estimate: this kernel is HBM-bound on the x read.
    param_bytes = sum(int(np.prod(a.shape)) * 4 for a in (wf_aug, w1_aug, w2_aug))
    cost = pl.CostEstimate(
        flops=2 * B * (in_feature * hf + hf * hcat + hcat * 2),
        transcendentals=2 * B,
        bytes_accessed=B * in_feature * 4 + B * 2 * 4 + param_bytes,
    )

    out = pl.pallas_call(
        adversarial_net_kernel,
        out_shape=jax.ShapeDtypeStruct((2, B), jnp.float32),
        grid_spec=pltpu.PrefetchScalarGridSpec(
            num_scalar_prefetch=0,
            grid=grid,
            in_specs=[x_spec, rep_spec(wf_aug), rep_spec(w1_aug), rep_spec(w2_aug)],
            out_specs=out_spec,
        ),
        compiler_params=pltpu.CompilerParams(
            dimension_semantics=("parallel",)),
        cost_estimate=cost,
    )(x, wf_aug, w1_aug, w2_aug)

    label_pred = out[0].reshape(B, 1)
    domain_pred = out[1].reshape(B, 1)
    return label_pred, domain_pred


# ---------------------------------------------------------------------------
# Parameter init + pure-JAX reference
# ---------------------------------------------------------------------------
def init_params(key, in_feature, feature_size=(10,), label_size=(10,), domain_size=(10,)):
    """Deterministic init mimicking PyTorch Linear default (U[-1/sqrt(fan_in), +])."""

    def linear(key, fan_in, fan_out):
        kw, kb = jax.random.split(key)
        bound = 1.0 / np.sqrt(fan_in)
        # stored as (in, out) — transposed relative to PyTorch's (out, in)
        w = jax.random.uniform(kw, (fan_in, fan_out), jnp.float32, -bound, bound)
        b = jax.random.uniform(kb, (1, fan_out), jnp.float32, -bound, bound)
        return w, b

    keys = jax.random.split(key, 5)
    wf, bf = linear(keys[0], in_feature, feature_size[0])
    wl1, bl1 = linear(keys[1], feature_size[-1], label_size[0])
    wl2, bl2 = linear(keys[2], label_size[-1], 1)
    wd1, bd1 = linear(keys[3], feature_size[-1], domain_size[0])
    wd2, bd2 = linear(keys[4], domain_size[-1], 1)
    return (wf, bf, wl1, bl1, wl2, bl2, wd1, bd1, wd2, bd2)


def reference_forward(x, params):
    """Pure-JAX reference for correctness check."""
    (wf, bf, wl1, bl1, wl2, bl2, wd1, bd1, wd2, bd2) = params
    h = jnp.maximum(x @ wf + bf, 0.0)
    lp = jax.nn.sigmoid(jnp.maximum(h @ wl1 + bl1, 0.0) @ wl2 + bl2)
    dp = jax.nn.sigmoid(jnp.maximum(h @ wd1 + bd1, 0.0) @ wd2 + bd2)
    return lp, dp


if __name__ == "__main__":
    key = jax.random.PRNGKey(0)
    kx, kp = jax.random.split(key)

    batch = 256          # lane-dense tiling: tile=128 -> grid of 2 (both TCs on v7x)
    in_feature = 32

    x = jax.random.normal(kx, (batch, in_feature), dtype=jnp.float32)
    params = init_params(kp, in_feature)

    # coeff (GRL strength) — computed for parity with the PyTorch forward,
    # but it only scales gradients in the hook, never forward values.
    iter_num = 1
    coeff = calc_coeff(iter_num, high=1.0, low=0.0, alpha=10.0, max_iter=10000.0)
    del coeff

    label_pred, domain_pred = adversarial_net_forward(x, params)
    label_pred = jax.block_until_ready(label_pred)
    domain_pred = jax.block_until_ready(domain_pred)

    lp_ref, dp_ref = reference_forward(x, params)
    np.testing.assert_allclose(np.asarray(label_pred), np.asarray(lp_ref),
                               rtol=1e-5, atol=1e-5)
    np.testing.assert_allclose(np.asarray(domain_pred), np.asarray(dp_ref),
                               rtol=1e-5, atol=1e-5)

    print("KERNEL_OK")
</pallas_src>

<mosaic_0001>
module attributes {stable_mosaic.version = 11 : i64} {
  func.func @adversarial_net_kernel(%arg0: i32, %arg1: memref<128x32xf32, #tpu.memory_space<vmem>>, %arg2: memref<33x10xf32, #tpu.memory_space<vmem>>, %arg3: memref<11x20xf32, #tpu.memory_space<vmem>>, %arg4: memref<2x21xf32, #tpu.memory_space<vmem>>, %arg5: memref<2x128xf32, #tpu.memory_space<vmem>>) attributes {dimension_semantics = [#tpu.dimension_semantics<parallel>], iteration_bounds = array<i64: 2>, scalar_prefetch = 0 : i64, scratch_operands = 0 : i64, tpu.core_type = #tpu.core_type<tc>, window_params = [{transform_indices = @transform_0, window_bounds = array<i64: 128, 32>}, {pipeline_mode = #tpu.pipeline_mode<synchronous>, transform_indices = @transform_1, window_bounds = array<i64: 33, 10>}, {pipeline_mode = #tpu.pipeline_mode<synchronous>, transform_indices = @transform_2, window_bounds = array<i64: 11, 20>}, {pipeline_mode = #tpu.pipeline_mode<synchronous>, transform_indices = @transform_3, window_bounds = array<i64: 2, 21>}, {transform_indices = @transform_4, window_bounds = array<i64: 2, 128>}]} {
    %c0 = arith.constant 0 : index
    %c0_0 = arith.constant 0 : index
    %0 = vector.load %arg1[%c0, %c0_0] : memref<128x32xf32, #tpu.memory_space<vmem>>, vector<128x32xf32>
    %c0_1 = arith.constant 0 : index
    %c0_2 = arith.constant 0 : index
    %1 = vector.load %arg2[%c0_1, %c0_2] : memref<33x10xf32, #tpu.memory_space<vmem>>, vector<33x10xf32>
    %2 = vector.extract_strided_slice %1 {offsets = [0, 0], sizes = [32, 10], strides = [1, 1]} : vector<33x10xf32> to vector<32x10xf32>
    %cst = arith.constant dense<0.000000e+00> : vector<128x10xf32>
    %3 = tpu.matmul %0, %2, %cst {dimension_numbers = #tpu.dot_dimension_numbers<[1], [0], [0], [1], [0, 0, 1, 1], [], []>} : vector<128x32xf32>, vector<32x10xf32>, vector<128x10xf32> -> vector<128x10xf32>
    %4 = vector.extract_strided_slice %1 {offsets = [32, 0], sizes = [1, 10], strides = [1, 1]} : vector<33x10xf32> to vector<1x10xf32>
    %5 = vector.broadcast %4 : vector<1x10xf32> to vector<128x10xf32>
    %6 = arith.addf %3, %5 : vector<128x10xf32>
    %cst_3 = arith.constant 0.000000e+00 : f32
    %7 = vector.broadcast %cst_3 : f32 to vector<128x10xf32>
    %8 = arith.maximumf %6, %7 : vector<128x10xf32>
    %c0_4 = arith.constant 0 : index
    %c0_5 = arith.constant 0 : index
    %9 = vector.load %arg3[%c0_4, %c0_5] : memref<11x20xf32, #tpu.memory_space<vmem>>, vector<11x20xf32>
    %10 = vector.extract_strided_slice %9 {offsets = [0, 0], sizes = [10, 20], strides = [1, 1]} : vector<11x20xf32> to vector<10x20xf32>
    %cst_6 = arith.constant dense<0.000000e+00> : vector<128x20xf32>
    %11 = tpu.matmul %8, %10, %cst_6 {dimension_numbers = #tpu.dot_dimension_numbers<[1], [0], [0], [1], [0, 0, 1, 1], [], []>} : vector<128x10xf32>, vector<10x20xf32>, vector<128x20xf32> -> vector<128x20xf32>
    %12 = vector.extract_strided_slice %9 {offsets = [10, 0], sizes = [1, 20], strides = [1, 1]} : vector<11x20xf32> to vector<1x20xf32>
    %13 = vector.broadcast %12 : vector<1x20xf32> to vector<128x20xf32>
    %14 = arith.addf %11, %13 : vector<128x20xf32>
    %cst_7 = arith.constant 0.000000e+00 : f32
    %15 = vector.broadcast %cst_7 : f32 to vector<128x20xf32>
    %16 = arith.maximumf %14, %15 : vector<128x20xf32>
    %c0_8 = arith.constant 0 : index
    %c0_9 = arith.constant 0 : index
    %17 = vector.load %arg4[%c0_8, %c0_9] : memref<2x21xf32, #tpu.memory_space<vmem>>, vector<2x21xf32>
    %18 = vector.extract_strided_slice %17 {offsets = [0, 0], sizes = [2, 20], strides = [1, 1]} : vector<2x21xf32> to vector<2x20xf32>
    %cst_10 = arith.constant dense<0.000000e+00> : vector<2x128xf32>
    %19 = tpu.matmul %18, %16, %cst_10 {dimension_numbers = #tpu.dot_dimension_numbers<[1], [1], [0], [0], [0, 0, 1, 0], [], []>} : vector<2x20xf32>, vector<128x20xf32>, vector<2x128xf32> -> vector<2x128xf32>
    %20 = vector.extract_strided_slice %17 {offsets = [0, 20], sizes = [2, 1], strides = [1, 1]} : vector<2x21xf32> to vector<2x1xf32>
    %21 = vector.broadcast %20 : vector<2x1xf32> to vector<2x128xf32>
    %22 = arith.addf %19, %21 : vector<2x128xf32>
    %23 = arith.negf %22 : vector<2x128xf32>
    %24 = math.exp %23 : vector<2x128xf32>
    %cst_11 = arith.constant 1.000000e+00 : f32
    %25 = vector.broadcast %cst_11 : f32 to vector<2x128xf32>
    %26 = arith.addf %25, %24 : vector<2x128xf32>
    %27 = arith.divf %25, %26 : vector<2x128xf32>
    %c0_12 = arith.constant 0 : index
    %c0_13 = arith.constant 0 : index
    %28 = vector.load %arg5[%c0_12, %c0_13] : memref<2x128xf32, #tpu.memory_space<vmem>>, vector<2x128xf32>
    tpu.vector_store %arg5[%c0_12, %c0_13], %27 {strides = array<i32>} : memref<2x128xf32, #tpu.memory_space<vmem>>, vector<2x128xf32>,
    return
  }
  func.func @transform_0(%arg0: i32) -> (i32, i32) {
    %c0_i32 = arith.constant 0 : i32
    %c0_i32_0 = arith.constant 0 : i32
    return %arg0, %c0_i32 : i32, i32
  }
  func.func @transform_1(%arg0: i32) -> (i32, i32) {
    %c0_i32 = arith.constant 0 : i32
    %c0_i32_0 = arith.constant 0 : i32
    %c0_i32_1 = arith.constant 0 : i32
    return %c0_i32, %c0_i32_0 : i32, i32
  }
  func.func @transform_2(%arg0: i32) -> (i32, i32) {
    %c0_i32 = arith.constant 0 : i32
    %c0_i32_0 = arith.constant 0 : i32
    %c0_i32_1 = arith.constant 0 : i32
    return %c0_i32, %c0_i32_0 : i32, i32
  }
  func.func @transform_3(%arg0: i32) -> (i32, i32) {
    %c0_i32 = arith.constant 0 : i32
    %c0_i32_0 = arith.constant 0 : i32
    %c0_i32_1 = arith.constant 0 : i32
    return %c0_i32, %c0_i32_0 : i32, i32
  }
  func.func @transform_4(%arg0: i32) -> (i32, i32) {
    %c0_i32 = arith.constant 0 : i32
    %c0_i32_0 = arith.constant 0 : i32
    return %c0_i32, %arg0 : i32, i32
  }
}

</mosaic_0001>

<llo_original>
// kernel: tpu_custom_call.1
$region0: #{tpu_custom_call.1}
  #allocation0 [shape = 'u32[]', space=smem, size = 0x4, offset = 0x4, fixed_abs, tag = 'smem constant byte address 0x4 - core index']
  #allocation1 [shape = 'u32[144,128]{1,0:T(1,128)}', space=vmem, size = 0x12000, scoped, tag = 'internal scratch']
  %s0 = inlined_call_operand.vmem [shape: f32[256,32], index: 0, kind: input, shape index: {}]
  %s1 = inlined_call_operand.vmem [shape: f32[33,10], index: 1, kind: input, shape index: {}]
  %s2 = inlined_call_operand.vmem [shape: f32[11,20], index: 2, kind: input, shape index: {}]
  %s3 = inlined_call_operand.vmem [shape: f32[2,21], index: 3, kind: input, shape index: {}]
  %s4 = inlined_call_operand.hbm [shape: f32[2,256], index: 4, kind: output, shape index: {}]
  %s5 = sld [smem:[#allocation0]]
  $region49: #{tpu_custom_call.1} parent=0
    _
  %s7 = ssub.s32 1, %s5
  %s8 = scalar_select 0, %s7, %s5
  $region1: #{tpu_custom_call.1} parent=0
    #allocation2 [shape = 'u8[2048]{0}', space=vmem, size = 0x800, scoped, tag = 'output window, operand 0']
    #allocation3 [shape = 's32[2]{0}', space=sflag, size = 0x8, scoped, tag = 'scoped memory for tpu_custom_call.1']
    %9 = vsyncpa [#allocation3], 0
    %s10 = scalar_lea.sflag [#allocation3], 1
    %11 = vsyncpa %s10, 0
    loop: start=0, step=1, limit=4
    $region2: #{tpu_custom_call.1} parent=1 // loop_pre_header
      _
    $region3: #{tpu_custom_call.1} parent=1 // loop_header
      %s13 = sphi 0, %s17
      %p14 = scmp.ge.s32.totalorder %s13, 4
      %s23 = sphi 0, %s25
      %s26 = sphi 0, %s23
      %s27 = sphi 0, %s26
      %s43 = sphi 0, %s27
      %s47 = sphi 0, %s47
      %s49 = sphi 0, %s47
      %s50 = sphi 0, %s49
      %s64 = sphi 0, %s50
      %s68 = sphi 0, %s68
      %s70 = sphi 0, %s68
      %s71 = sphi 0, %s70
      %s85 = sphi 0, %s71
      %s89 = sphi 0, %s89
      %s91 = sphi 0, %s89
      %s92 = sphi 0, %s91
      %s106 = sphi 0, %s92
      %s112 = sphi 0, %s114
      %s115 = sphi 0, %s112
      %s116 = sphi 0, %s115
      %s132 = sphi 0, %s116
    $region4: #{tpu_custom_call.1} parent=1 // loop_header_branch
      %16 = sbr.rel (%p14) target = $region8
    $region5: #{tpu_custom_call.1} parent=1 // loop_body
      %s18 = ssub.s32 %s13, 1
      %s19 = ssub.s32 %s13, 2
      %s20 = sadd.s32 %s13, 1
      %s21 = ssub.s32 %s13, %s20
      %p22 = scmp.eq.s32.totalorder %s21, 0
      %s24 = sadd.s32 %s23, 1
      %s25 = scalar_select %p22, %s23, %s24
      %p28 = pneg %p22
      %p29 = scmp.eq.s32.totalorder %s13, 1
      %p30 = por %p28, %p29
      %p31 = scmp.ne.s32.totalorder %s23, %s26
      %p32 = scmp.eq.s32.totalorder %s13, 0
      %p33 = por %p31, %p32
      %p34 = scmp.ne.s32.totalorder %s23, %s26
      %p35 = scmp.eq.s32.totalorder %s18, 1
      %p36 = por %p34, %p35
      %p37 = scmp.ne.s32.totalorder %s26, %s27
      %p38 = scmp.eq.s32.totalorder %s18, 0
      %p39 = por %p37, %p38
      %p40 = scmp.ne.s32.totalorder %s26, %s27
      %p41 = scmp.eq.s32.totalorder %s19, 1
      %p42 = por %p40, %p41
      %p44 = scmp.ne.s32.totalorder %s27, %s43
      %p45 = scmp.eq.s32.totalorder %s19, 0
      %p46 = por %p44, %p45
      %s48 = sadd.s32 %s47, 1
      %p51 = scmp.eq.s32.totalorder %s13, 1
      %p52 = scmp.ne.s32.totalorder %s47, %s49
      %p53 = scmp.eq.s32.totalorder %s13, 0
      %p54 = por %p52, %p53
      %p55 = scmp.ne.s32.totalorder %s47, %s49
      %p56 = scmp.eq.s32.totalorder %s18, 1
      %p57 = por %p55, %p56
      %p58 = scmp.ne.s32.totalorder %s49, %s50
      %p59 = scmp.eq.s32.totalorder %s18, 0
      %p60 = por %p58, %p59
      %p61 = scmp.ne.s32.totalorder %s49, %s50
      %p62 = scmp.eq.s32.totalorder %s19, 1
      %p63 = por %p61, %p62
      %p65 = scmp.ne.s32.totalorder %s50, %s64
      %p66 = scmp.eq.s32.totalorder %s19, 0
      %p67 = por %p65, %p66
      %s69 = sadd.s32 %s68, 1
      %p72 = scmp.eq.s32.totalorder %s13, 1
      %p73 = scmp.ne.s32.totalorder %s68, %s70
      %p74 = scmp.eq.s32.totalorder %s13, 0
      %p75 = por %p73, %p74
      %p76 = scmp.ne.s32.totalorder %s68, %s70
      %p77 = scmp.eq.s32.totalorder %s18, 1
      %p78 = por %p76, %p77
      %p79 = scmp.ne.s32.totalorder %s70, %s71
      %p80 = scmp.eq.s32.totalorder %s18, 0
      %p81 = por %p79, %p80
      %p82 = scmp.ne.s32.totalorder %s70, %s71
      %p83 = scmp.eq.s32.totalorder %s19, 1
      %p84 = por %p82, %p83
      %p86 = scmp.ne.s32.totalorder %s71, %s85
      %p87 = scmp.eq.s32.totalorder %s19, 0
      %p88 = por %p86, %p87
      %s90 = sadd.s32 %s89, 1
      %p93 = scmp.eq.s32.totalorder %s13, 1
      %p94 = scmp.ne.s32.totalorder %s89, %s91
      %p95 = scmp.eq.s32.totalorder %s13, 0
      %p96 = por %p94, %p95
      %p97 = scmp.ne.s32.totalorder %s89, %s91
      %p98 = scmp.eq.s32.totalorder %s18, 1
      %p99 = por %p97, %p98
      %p100 = scmp.ne.s32.totalorder %s91, %s92
      %p101 = scmp.eq.s32.totalorder %s18, 0
      %p102 = por %p100, %p101
      %p103 = scmp.ne.s32.totalorder %s91, %s92
      %p104 = scmp.eq.s32.totalorder %s19, 1
      %p105 = por %p103, %p104
      %p107 = scmp.ne.s32.totalorder %s92, %s106
      %p108 = scmp.eq.s32.totalorder %s19, 0
      %p109 = por %p107, %p108
      %s110 = ssub.s32 %s13, %s20
      %p111 = scmp.eq.s32.totalorder %s110, 0
      %s113 = sadd.s32 %s112, 1
      %s114 = scalar_select %p111, %s112, %s113
      %p117 = pneg %p111
      %p118 = scmp.eq.s32.totalorder %s13, 1
      %p119 = por %p117, %p118
      %p120 = scmp.ne.s32.totalorder %s112, %s115
      %p121 = scmp.eq.s32.totalorder %s13, 0
      %p122 = por %p120, %p121
      %p123 = scmp.ne.s32.totalorder %s112, %s115
      %p124 = scmp.eq.s32.totalorder %s18, 1
      %p125 = por %p123, %p124
      %p126 = scmp.ne.s32.totalorder %s115, %s116
      %p127 = scmp.eq.s32.totalorder %s18, 0
      %p128 = por %p126, %p127
      %p129 = scmp.ne.s32.totalorder %s115, %s116
      %p130 = scmp.eq.s32.totalorder %s19, 1
      %p131 = por %p129, %p130
      %p133 = scmp.ne.s32.totalorder %s116, %s132
      %p134 = scmp.eq.s32.totalorder %s19, 0
      %p135 = por %p133, %p134
      %p136 = scmp.le.s32.totalorder 1, %s13
      %p137 = scmp.lt.s32.totalorder %s13, 3
      %p138 = pnand %p136, %p137
      %p139 = pneg %p138
      // Predicated region
      $region9: #{tpu_custom_call.1} parent=5 // pred_check
        _
      $region10: #{tpu_custom_call.1} parent=5 // pred_check_branch
        %141 = sbr.rel (%p138) target = $region12
      $region11: #{tpu_custom_call.1} parent=5 // pred_region
        %s142 = ssub.s32 %s13, 1
        // Predicated region
        $region13: #{tpu_custom_call.1} parent=11 // pred_check
          %p143 = pneg %p60
        $region14: #{tpu_custom_call.1} parent=11 // pred_check_branch
          %145 = sbr.rel (%p143) target = $region16
        $region15: #{tpu_custom_call.1} parent=11 // pred_region
          _
        $region16: #{tpu_custom_call.1} parent=11 // pred_fallthru
          _
        // Predicated region
        $region17: #{tpu_custom_call.1} parent=11 // pred_check
          %p146 = pneg %p81
        $region18: #{tpu_custom_call.1} parent=11 // pred_check_branch
          %148 = sbr.rel (%p146) target = $region20
        $region19: #{tpu_custom_call.1} parent=11 // pred_region
          _
        $region20: #{tpu_custom_call.1} parent=11 // pred_fallthru
          _
        // Predicated region
        $region21: #{tpu_custom_call.1} parent=11 // pred_check
          %p149 = pneg %p102
        $region22: #{tpu_custom_call.1} parent=11 // pred_check_branch
          %151 = sbr.rel (%p149) target = $region24
        $region23: #{tpu_custom_call.1} parent=11 // pred_region
          _
        $region24: #{tpu_custom_call.1} parent=11 // pred_fallthru
          _
      $region12: #{tpu_custom_call.1} parent=5 // pred_fallthru
        _
      %p152 = scmp.lt.s32.totalorder %s13, 2
      // Predicated region
      $region25: #{tpu_custom_call.1} parent=5 // pred_check
        %p153 = pneg %p152
      $region26: #{tpu_custom_call.1} parent=5 // pred_check_branch
        %155 = sbr.rel (%p153) target = $region28
      $region27: #{tpu_custom_call.1} parent=5 // pred_region
        // Predicated region
        $region29: #{tpu_custom_call.1} parent=27 // pred_check
          %p156 = pneg %p33
        $region30: #{tpu_custom_call.1} parent=27 // pred_check_branch
          %158 = sbr.rel (%p156) target = $region32
        $region31: #{tpu_custom_call.1} parent=27 // pred_region
          %s159 = smul.u32 16, %s13
          %p160 = scmp.lt.s32.totalorder %s159, 31
          %s161 = scalar_select %p160, %s159, 31
          %s162 = smul.addr %s161, 8
          %s163 = scalar_lea.vmem %s0, %s162
          %s164 = smul.u32 16, %s13
        $region32: #{tpu_custom_call.1} parent=27 // pred_fallthru
          _
      $region28: #{tpu_custom_call.1} parent=5 // pred_fallthru
        _
      %p165 = scmp.le.s32.totalorder 1, %s13
      %p166 = scmp.lt.s32.totalorder %s13, 3
      %p167 = pnand %p165, %p166
      %p168 = pneg %p167
      // Predicated region
      $region33: #{tpu_custom_call.1} parent=5 // pred_check
        _
      $region34: #{tpu_custom_call.1} parent=5 // pred_check_branch
        %170 = sbr.rel (%p167) target = $region36
      $region35: #{tpu_custom_call.1} parent=5 // pred_region
        %s171 = ssub.s32 %s13, 1
        %s172 = smul.u32 16, %s18
        %p173 = scmp.lt.s32.totalorder %s172, 31
        %s174 = scalar_select %p173, %s172, 31
        %s175 = smul.addr %s174, 8
        %s176 = scalar_lea.vmem %s0, %s175
        %p177 = pneg %p39
        %p178 = pneg %p36
        %p179 = pneg %p60
        %p180 = pneg %p57
        %p181 = pneg %p81
        %p182 = pneg %p78
        %p183 = pneg %p102
        %p184 = pneg %p99
        %p185 = pneg %p128
        %p186 = pneg %p125
        %s187 = sand.u32 %s115, 1
        %s188 = scalar_lea.sflag [#allocation3], %s187
        %s189 = sand.u32 %s115, 1
        %s190 = smul.addr %s189, 2
        %s191 = scalar_lea.vmem [#allocation2], %s190
        %s192 = smul.u32 16, %s18
        %p193 = scmp.lt.s32.totalorder %s192, 31
        %s194 = scalar_select %p193, %s192, 31
        %s195 = smul.addr %s194, 8
        %s196 = scalar_lea.vmem %s0, %s195
        %s197 = smul.u32 16, %s18
        %v198 = vld [vmem:[%s196] sm:$0xff]
        %v199 = vld [vmem:[%s196 + $0x8] sm:$0xff]
        %v200 = vld [vmem:[%s196 + $0x10] sm:$0xff]
        %v201 = vld [vmem:[%s196 + $0x18] sm:$0xff]
        %v202 = vld [vmem:[%s196 + $0x20] sm:$0xff]
        %v203 = vld [vmem:[%s196 + $0x28] sm:$0xff]
        %v204 = vld [vmem:[%s196 + $0x30] sm:$0xff]
        %v205 = vld [vmem:[%s196 + $0x38] sm:$0xff]
        %v206 = vld [vmem:[%s196 + $0x40] sm:$0xff]
        %v207 = vld [vmem:[%s196 + $0x48] sm:$0xff]
        %v208 = vld [vmem:[%s196 + $0x50] sm:$0xff]
        %v209 = vld [vmem:[%s196 + $0x58] sm:$0xff]
        %v210 = vld [vmem:[%s196 + $0x60] sm:$0xff]
        %v211 = vld [vmem:[%s196 + $0x68] sm:$0xff]
        %v212 = vld [vmem:[%s196 + $0x70] sm:$0xff]
        %v213 = vld [vmem:[%s196 + $0x78] sm:$0xff]
        %v214 = vld [vmem:[%s1] sm:$0xff]
        %v215 = vld [vmem:[%s1 + $0x8] sm:$0xff]
        %v216 = vld [vmem:[%s1 + $0x10] sm:$0xff]
        %v217 = vld [vmem:[%s1 + $0x18] sm:$0xff]
        %v218 = vld [vmem:[%s1 + $0x20] sm:$0x1]
        %v219 = vlaneseq
        %v220 = vshrl.u32 %v219, 7
        %v221 = vsub.s32 0, %v220
        %v222 = vrot.slane %v218, %v221
        %vm223 = vcmask 261120
        %v225 = vsel %vm223, %v198, 0
        %v228 = vsel %vm223, %v199, 0
        %v231 = vsel %vm223, %v200, 0
        %v234 = vsel %vm223, %v201, 0
        %v237 = vsel %vm223, %v202, 0
        %v240 = vsel %vm223, %v203, 0
        %v243 = vsel %vm223, %v204, 0
        %v246 = vsel %vm223, %v205, 0
        %v249 = vsel %vm223, %v206, 0
        %v252 = vsel %vm223, %v207, 0
        %v255 = vsel %vm223, %v208, 0
        %v258 = vsel %vm223, %v209, 0
        %v261 = vsel %vm223, %v210, 0
        %v264 = vsel %vm223, %v211, 0
        %v267 = vsel %vm223, %v212, 0
        %v270 = vsel %vm223, %v213, 0
        %272 = vmatprep.subr.mxu0 0.0
        %273 = vmatpush1.msra.mxu0 %v214
        %274 = vmatprep.subr.mxu0 0.0
        %275 = vmatpush1.msra.mxu0 %v215
        %276 = vmatprep.subr.mxu0 0.0
        %277 = vmatpush1.msra.mxu0 %v216
        %278 = vmatprep.subr.mxu0 0.0
        %279 = vmatpush1.msra.mxu0 %v217
        %280 = vmatprep.subr.mxu0 0.0
        %281 = vmatpush1.msra.mxu0 0.0
        %282 = vmatprep.subr.mxu0 0.0
        %283 = vmatpush1.msra.mxu0 0.0
        %284 = vmatprep.subr.mxu0 0.0
        %285 = vmatpush1.msra.mxu0 0.0
        %286 = vmatprep.subr.mxu0 0.0
        %287 = vmatpush1.msra.mxu0 0.0
        %288 = vmatprep.subr.mxu0 0.0
        %289 = vmatpush1.msra.mxu0 0.0
        %290 = vmatprep.subr.mxu0 0.0
        %291 = vmatpush1.msra.mxu0 0.0
        %292 = vmatprep.subr.mxu0 0.0
        %293 = vmatpush1.msra.mxu0 0.0
        %294 = vmatprep.subr.mxu0 0.0
        %295 = vmatpush1.msra.mxu0 0.0
        %296 = vmatprep.subr.mxu0 0.0
        %297 = vmatpush1.msra.mxu0 0.0
        %298 = vmatprep.subr.mxu0 0.0
        %299 = vmatpush1.msra.mxu0 0.0
        %300 = vmatprep.subr.mxu0 0.0
        %301 = vmatpush1.msra.mxu0 0.0
        %302 = vmatprep.subr.mxu0 0.0
        %303 = vmatpush1.msra.mxu0 0.0
        %304 = vmatprep.subr.mxu0 0.0
        %305 = vmatpush1.msra.mxu0 0.0
        %306 = vmatprep.subr.mxu0 0.0
        %307 = vmatpush1.msra.mxu0 0.0
        %308 = vmatprep.subr.mxu0 0.0
        %309 = vmatpush1.msra.mxu0 0.0
        %310 = vmatprep.subr.mxu0 0.0
        %311 = vmatpush1.msra.mxu0 0.0
        %312 = vmatprep.subr.mxu0 0.0
        %313 = vmatpush1.msra.mxu0 0.0
        %314 = vmatprep.subr.mxu0 0.0
        %315 = vmatpush1.msra.mxu0 0.0
        %316 = vmatprep.subr.mxu0 0.0
        %317 = vmatpush1.msra.mxu0 0.0
        %318 = vmatprep.subr.mxu0 0.0
        %319 = vmatpush1.msra.mxu0 0.0
        %320 = vmatprep.subr.mxu0 0.0
        %321 = vmatpush1.msra.mxu0 0.0
        %322 = vmatprep.subr.mxu0 0.0
        %323 = vmatpush1.msra.mxu0 0.0
        %324 = vmatprep.subr.mxu0 0.0
        %325 = vmatpush1.msra.mxu0 0.0
        %326 = vmatprep.subr.mxu0 0.0
        %327 = vmatpush1.msra.mxu0 0.0
        %328 = vmatprep.subr.mxu0 0.0
        %329 = vmatpush1.msra.mxu0 0.0
        %330 = vmatprep.subr.mxu0 0.0
        %331 = vmatpush1.msra.mxu0 0.0
        %332 = vmatprep.subr.mxu0 0.0
        %333 = vmatpush1.msra.mxu0 0.0
        %334 = vmatprep.subr.mxu0 0.0
        %335 = vmatpush1.msra.mxu0 0.0
        %336 = vmatprep.mubr.f32.mxu0 0.0
        %337 = vmatmul.mubr.f32.gmra.mrb[0].mxu0 %v225
        %v338 = vpop.f32.mrb[0].mxu0
        %v339 = vadd.f32 %v222, %v338
        %v340 = vpop.f32.mrb[0].mxu0
        %341 = vmatprep.mubr.f32.mxu0 0.0
        %342 = vmatmul.mubr.f32.gmra.mrb[0].mxu0 %v228
        %v343 = vpop.f32.mrb[0].mxu0
        %v344 = vadd.f32 %v222, %v343
        %v345 = vpop.f32.mrb[0].mxu0
        %346 = vmatprep.mubr.f32.mxu0 0.0
        %347 = vmatmul.mubr.f32.gmra.mrb[0].mxu0 %v231
        %v348 = vpop.f32.mrb[0].mxu0
        %v349 = vadd.f32 %v222, %v348
        %v350 = vpop.f32.mrb[0].mxu0
        %351 = vmatprep.mubr.f32.mxu0 0.0
        %352 = vmatmul.mubr.f32.gmra.mrb[0].mxu0 %v234
        %v353 = vpop.f32.mrb[0].mxu0
        %v354 = vadd.f32 %v222, %v353
        %v355 = vpop.f32.mrb[0].mxu0
        %356 = vmatprep.mubr.f32.mxu0 0.0
        %357 = vmatmul.mubr.f32.gmra.mrb[0].mxu0 %v237
        %v358 = vpop.f32.mrb[0].mxu0
        %v359 = vadd.f32 %v222, %v358
        %v360 = vpop.f32.mrb[0].mxu0
        %361 = vmatprep.mubr.f32.mxu0 0.0
        %362 = vmatmul.mubr.f32.gmra.mrb[0].mxu0 %v240
        %v363 = vpop.f32.mrb[0].mxu0
        %v364 = vadd.f32 %v222, %v363
        %v365 = vpop.f32.mrb[0].mxu0
        %366 = vmatprep.mubr.f32.mxu0 0.0
        %367 = vmatmul.mubr.f32.gmra.mrb[0].mxu0 %v243
        %v368 = vpop.f32.mrb[0].mxu0
        %v369 = vadd.f32 %v222, %v368
        %v370 = vpop.f32.mrb[0].mxu0
        %371 = vmatprep.mubr.f32.mxu0 0.0
        %372 = vmatmul.mubr.f32.gmra.mrb[0].mxu0 %v246
        %v373 = vpop.f32.mrb[0].mxu0
        %v374 = vadd.f32 %v222, %v373
        %v375 = vpop.f32.mrb[0].mxu0
        %376 = vmatprep.mubr.f32.mxu0 0.0
        %377 = vmatmul.mubr.f32.gmra.mrb[0].mxu0 %v249
        %v378 = vpop.f32.mrb[0].mxu0
        %v379 = vadd.f32 %v222, %v378
        %v380 = vpop.f32.mrb[0].mxu0
        %381 = vmatprep.mubr.f32.mxu0 0.0
        %382 = vmatmul.mubr.f32.gmra.mrb[0].mxu0 %v252
        %v383 = vpop.f32.mrb[0].mxu0
        %v384 = vadd.f32 %v222, %v383
        %v385 = vpop.f32.mrb[0].mxu0
        %386 = vmatprep.mubr.f32.mxu0 0.0
        %387 = vmatmul.mubr.f32.gmra.mrb[0].mxu0 %v255
        %v388 = vpop.f32.mrb[0].mxu0
        %v389 = vadd.f32 %v222, %v388
        %v390 = vpop.f32.mrb[0].mxu0
        %391 = vmatprep.mubr.f32.mxu0 0.0
        %392 = vmatmul.mubr.f32.gmra.mrb[0].mxu0 %v258
        %v393 = vpop.f32.mrb[0].mxu0
        %v394 = vadd.f32 %v222, %v393
        %v395 = vpop.f32.mrb[0].mxu0
        %396 = vmatprep.mubr.f32.mxu0 0.0
        %397 = vmatmul.mubr.f32.gmra.mrb[0].mxu0 %v261
        %v398 = vpop.f32.mrb[0].mxu0
        %v399 = vadd.f32 %v222, %v398
        %v400 = vpop.f32.mrb[0].mxu0
        %401 = vmatprep.mubr.f32.mxu0 0.0
        %402 = vmatmul.mubr.f32.gmra.mrb[0].mxu0 %v264
        %v403 = vpop.f32.mrb[0].mxu0
        %v404 = vadd.f32 %v222, %v403
        %v405 = vpop.f32.mrb[0].mxu0
        %406 = vmatprep.mubr.f32.mxu0 0.0
        %407 = vmatmul.mubr.f32.gmra.mrb[0].mxu0 %v267
        %v408 = vpop.f32.mrb[0].mxu0
        %v409 = vadd.f32 %v222, %v408
        %v410 = vpop.f32.mrb[0].mxu0
        %411 = vmatprep.mubr.f32.mxu0 0.0
        %412 = vmatmul.mubr.f32.gmra.mrb[0].mxu0 %v270
        %v413 = vpop.f32.mrb[0].mxu0
        %v414 = vadd.f32 %v222, %v413
        %v415 = vpop.f32.mrb[0].mxu0
        %416 = vdwg.mxu0
        %v417 = vmax.f32 %v339, 0.0
        %v418 = vmax.f32 %v344, 0.0
        %v419 = vmax.f32 %v349, 0.0
        %v420 = vmax.f32 %v354, 0.0
        %v421 = vmax.f32 %v359, 0.0
        %v422 = vmax.f32 %v364, 0.0
        %v423 = vmax.f32 %v369, 0.0
        %v424 = vmax.f32 %v374, 0.0
        %v425 = vmax.f32 %v379, 0.0
        %v426 = vmax.f32 %v384, 0.0
        %v427 = vmax.f32 %v389, 0.0
        %v428 = vmax.f32 %v394, 0.0
        %v429 = vmax.f32 %v399, 0.0
        %v430 = vmax.f32 %v404, 0.0
        %v431 = vmax.f32 %v409, 0.0
        %v432 = vmax.f32 %v414, 0.0
        %v433 = vld [vmem:[%s2] sm:$0xff]
        %v434 = vld [vmem:[%s2 + $0x8] sm:$0x7]
        %v435 = vlaneseq
        %v436 = vshrl.u32 %v435, 7
        %v437 = vsub.s32 2, %v436
        %v438 = vrot.slane %v434, %v437
        %vm439 = vcmask 80896
        %v441 = vsel %vm439, %v417, 0
        %v444 = vsel %vm439, %v418, 0
        %v447 = vsel %vm439, %v419, 0
        %v450 = vsel %vm439, %v420, 0
        %v453 = vsel %vm439, %v421, 0
        %v456 = vsel %vm439, %v422, 0
        %v459 = vsel %vm439, %v423, 0
        %v462 = vsel %vm439, %v424, 0
        %v465 = vsel %vm439, %v425, 0
        %v468 = vsel %vm439, %v426, 0
        %v471 = vsel %vm439, %v427, 0
        %v474 = vsel %vm439, %v428, 0
        %v477 = vsel %vm439, %v429, 0
        %v480 = vsel %vm439, %v430, 0
        %v483 = vsel %vm439, %v431, 0
        %v486 = vsel %vm439, %v432, 0
        %vm488 = vcmask 1041408
        %v490 = vsel %vm488, %v434, 0
        %492 = vmatprep.subr.mxu0 0.0
        %493 = vmatpush1.msra.mxu0 %v433
        %494 = vmatprep.subr.mxu0 0.0
        %495 = vmatpush1.msra.mxu0 %v490
        %496 = vmatprep.subr.mxu0 0.0
        %497 = vmatpush1.msra.mxu0 0.0
        %498 = vmatprep.subr.mxu0 0.0
        %499 = vmatpush1.msra.mxu0 0.0
        %500 = vmatprep.subr.mxu0 0.0
        %501 = vmatpush1.msra.mxu0 0.0
        %502 = vmatprep.subr.mxu0 0.0
        %503 = vmatpush1.msra.mxu0 0.0
        %504 = vmatprep.subr.mxu0 0.0
        %505 = vmatpush1.msra.mxu0 0.0
        %506 = vmatprep.subr.mxu0 0.0
        %507 = vmatpush1.msra.mxu0 0.0
        %508 = vmatprep.subr.mxu0 0.0
        %509 = vmatpush1.msra.mxu0 0.0
        %510 = vmatprep.subr.mxu0 0.0
        %511 = vmatpush1.msra.mxu0 0.0
        %512 = vmatprep.subr.mxu0 0.0
        %513 = vmatpush1.msra.mxu0 0.0
        %514 = vmatprep.subr.mxu0 0.0
        %515 = vmatpush1.msra.mxu0 0.0
        %516 = vmatprep.subr.mxu0 0.0
        %517 = vmatpush1.msra.mxu0 0.0
        %518 = vmatprep.subr.mxu0 0.0
        %519 = vmatpush1.msra.mxu0 0.0
        %520 = vmatprep.subr.mxu0 0.0
        %521 = vmatpush1.msra.mxu0 0.0
        %522 = vmatprep.subr.mxu0 0.0
        %523 = vmatpush1.msra.mxu0 0.0
        %524 = vmatprep.subr.mxu0 0.0
        %525 = vmatpush1.msra.mxu0 0.0
        %526 = vmatprep.subr.mxu0 0.0
        %527 = vmatpush1.msra.mxu0 0.0
        %528 = vmatprep.subr.mxu0 0.0
        %529 = vmatpush1.msra.mxu0 0.0
        %530 = vmatprep.subr.mxu0 0.0
        %531 = vmatpush1.msra.mxu0 0.0
        %532 = vmatprep.subr.mxu0 0.0
        %533 = vmatpush1.msra.mxu0 0.0
        %534 = vmatprep.subr.mxu0 0.0
        %535 = vmatpush1.msra.mxu0 0.0
        %536 = vmatprep.subr.mxu0 0.0
        %537 = vmatpush1.msra.mxu0 0.0
        %538 = vmatprep.subr.mxu0 0.0
        %539 = vmatpush1.msra.mxu0 0.0
        %540 = vmatprep.subr.mxu0 0.0
        %541 = vmatpush1.msra.mxu0 0.0
        %542 = vmatprep.subr.mxu0 0.0
        %543 = vmatpush1.msra.mxu0 0.0
        %544 = vmatprep.subr.mxu0 0.0
        %545 = vmatpush1.msra.mxu0 0.0
        %546 = vmatprep.subr.mxu0 0.0
        %547 = vmatpush1.msra.mxu0 0.0
        %548 = vmatprep.subr.mxu0 0.0
        %549 = vmatpush1.msra.mxu0 0.0
        %550 = vmatprep.subr.mxu0 0.0
        %551 = vmatpush1.msra.mxu0 0.0
        %552 = vmatprep.subr.mxu0 0.0
        %553 = vmatpush1.msra.mxu0 0.0
        %554 = vmatprep.subr.mxu0 0.0
        %555 = vmatpush1.msra.mxu0 0.0
        %556 = vmatprep.mubr.f32.mxu0 0.0
        %557 = vmatmul.mubr.f32.gmra.mrb[0].mxu0 %v441
        %v558 = vpop.f32.mrb[0].mxu0
        %v559 = vadd.f32 %v438, %v558
        %v560 = vpop.f32.mrb[0].mxu0
        %561 = vmatprep.mubr.f32.mxu0 0.0
        %562 = vmatmul.mubr.f32.gmra.mrb[0].mxu0 %v444
        %v563 = vpop.f32.mrb[0].mxu0
        %v564 = vadd.f32 %v438, %v563
        %v565 = vpop.f32.mrb[0].mxu0
        %566 = vmatprep.mubr.f32.mxu0 0.0
        %567 = vmatmul.mubr.f32.gmra.mrb[0].mxu0 %v447
        %v568 = vpop.f32.mrb[0].mxu0
        %v569 = vadd.f32 %v438, %v568
        %v570 = vpop.f32.mrb[0].mxu0
        %571 = vmatprep.mubr.f32.mxu0 0.0
        %572 = vmatmul.mubr.f32.gmra.mrb[0].mxu0 %v450
        %v573 = vpop.f32.mrb[0].mxu0
        %v574 = vadd.f32 %v438, %v573
        %v575 = vpop.f32.mrb[0].mxu0
        %576 = vmatprep.mubr.f32.mxu0 0.0
        %577 = vmatmul.mubr.f32.gmra.mrb[0].mxu0 %v453
        %v578 = vpop.f32.mrb[0].mxu0
        %v579 = vadd.f32 %v438, %v578
        %v580 = vpop.f32.mrb[0].mxu0
        %581 = vmatprep.mubr.f32.mxu0 0.0
        %582 = vmatmul.mubr.f32.gmra.mrb[0].mxu0 %v456
        %v583 = vpop.f32.mrb[0].mxu0
        %v584 = vadd.f32 %v438, %v583
        %v585 = vpop.f32.mrb[0].mxu0
        %586 = vmatprep.mubr.f32.mxu0 0.0
        %587 = vmatmul.mubr.f32.gmra.mrb[0].mxu0 %v459
        %v588 = vpop.f32.mrb[0].mxu0
        %v589 = vadd.f32 %v438, %v588
        %v590 = vpop.f32.mrb[0].mxu0
        %591 = vmatprep.mubr.f32.mxu0 0.0
        %592 = vmatmul.mubr.f32.gmra.mrb[0].mxu0 %v462
        %v593 = vpop.f32.mrb[0].mxu0
        %v594 = vadd.f32 %v438, %v593
        %v595 = vpop.f32.mrb[0].mxu0
        %596 = vmatprep.mubr.f32.mxu0 0.0
        %597 = vmatmul.mubr.f32.gmra.mrb[0].mxu0 %v465
        %v598 = vpop.f32.mrb[0].mxu0
        %v599 = vadd.f32 %v438, %v598
        %v600 = vpop.f32.mrb[0].mxu0
        %601 = vmatprep.mubr.f32.mxu0 0.0
        %602 = vmatmul.mubr.f32.gmra.mrb[0].mxu0 %v468
        %v603 = vpop.f32.mrb[0].mxu0
        %v604 = vadd.f32 %v438, %v603
        %v605 = vpop.f32.mrb[0].mxu0
        %606 = vmatprep.mubr.f32.mxu0 0.0
        %607 = vmatmul.mubr.f32.gmra.mrb[0].mxu0 %v471
        %v608 = vpop.f32.mrb[0].mxu0
        %v609 = vadd.f32 %v438, %v608
        %v610 = vpop.f32.mrb[0].mxu0
        %611 = vmatprep.mubr.f32.mxu0 0.0
        %612 = vmatmul.mubr.f32.gmra.mrb[0].mxu0 %v474
        %v613 = vpop.f32.mrb[0].mxu0
        %v614 = vadd.f32 %v438, %v613
        %v615 = vpop.f32.mrb[0].mxu0
        %616 = vmatprep.mubr.f32.mxu0 0.0
        %617 = vmatmul.mubr.f32.gmra.mrb[0].mxu0 %v477
        %v618 = vpop.f32.mrb[0].mxu0
        %v619 = vadd.f32 %v438, %v618
        %v620 = vpop.f32.mrb[0].mxu0
        %621 = vmatprep.mubr.f32.mxu0 0.0
        %622 = vmatmul.mubr.f32.gmra.mrb[0].mxu0 %v480
        %v623 = vpop.f32.mrb[0].mxu0
        %v624 = vadd.f32 %v438, %v623
        %v625 = vpop.f32.mrb[0].mxu0
        %626 = vmatprep.mubr.f32.mxu0 0.0
        %627 = vmatmul.mubr.f32.gmra.mrb[0].mxu0 %v483
        %v628 = vpop.f32.mrb[0].mxu0
        %v629 = vadd.f32 %v438, %v628
        %v630 = vpop.f32.mrb[0].mxu0
        %631 = vmatprep.mubr.f32.mxu0 0.0
        %632 = vmatmul.mubr.f32.gmra.mrb[0].mxu0 %v486
        %v633 = vpop.f32.mrb[0].mxu0
        %v634 = vadd.f32 %v438, %v633
        %v635 = vpop.f32.mrb[0].mxu0
        %636 = vdwg.mxu0
        %v637 = vmax.f32 %v559, 0.0
        %v638 = vmax.f32 %v564, 0.0
        %v639 = vmax.f32 %v569, 0.0
        %v640 = vmax.f32 %v574, 0.0
        %v641 = vmax.f32 %v579, 0.0
        %v642 = vmax.f32 %v584, 0.0
        %v643 = vmax.f32 %v589, 0.0
        %v644 = vmax.f32 %v594, 0.0
        %v645 = vmax.f32 %v599, 0.0
        %v646 = vmax.f32 %v604, 0.0
        %v647 = vmax.f32 %v609, 0.0
        %v648 = vmax.f32 %v614, 0.0
        %v649 = vmax.f32 %v619, 0.0
        %v650 = vmax.f32 %v624, 0.0
        %v651 = vmax.f32 %v629, 0.0
        %v652 = vmax.f32 %v634, 0.0
        %v653 = vld [vmem:[%s3] sm:$0x3]
        %655 = vset.pattern.permute.xlu0 20
        %656 = vperm.xlu0 %655, %v653
        %v657 = vpop.permute.xlu0 %656
        %vm659 = vcmask 162816
        %v660 = vsel %vm659, %v653, 0
        %v663 = vsel %vm659, %v637, 0
        %v666 = vsel %vm659, %v638, 0
        %v669 = vsel %vm659, %v639, 0
        %v672 = vsel %vm659, %v640, 0
        %v675 = vsel %vm659, %v641, 0
        %v678 = vsel %vm659, %v642, 0
        %v681 = vsel %vm659, %v643, 0
        %v684 = vsel %vm659, %v644, 0
        %v687 = vsel %vm659, %v645, 0
        %v690 = vsel %vm659, %v646, 0
        %v693 = vsel %vm659, %v647, 0
        %v696 = vsel %vm659, %v648, 0
        %v699 = vsel %vm659, %v649, 0
        %v702 = vsel %vm659, %v650, 0
        %v705 = vsel %vm659, %v651, 0
        %v708 = vsel %vm659, %v652, 0
        %710 = vmatprep.subr.mxu0 0.0
        %711 = vmatpush1.xpose.msra.mxu0 %v663
        %712 = vmatprep.subr.mxu0 0.0
        %713 = vmatpush1.xpose.msra.mxu0 %v666
        %714 = vmatprep.subr.mxu0 0.0
        %715 = vmatpush1.xpose.msra.mxu0 %v669
        %716 = vmatprep.subr.mxu0 0.0
        %717 = vmatpush1.xpose.msra.mxu0 %v672
        %718 = vmatprep.subr.mxu0 0.0
        %719 = vmatpush1.xpose.msra.mxu0 %v675
        %720 = vmatprep.subr.mxu0 0.0
        %721 = vmatpush1.xpose.msra.mxu0 %v678
        %722 = vmatprep.subr.mxu0 0.0
        %723 = vmatpush1.xpose.msra.mxu0 %v681
        %724 = vmatprep.subr.mxu0 0.0
        %725 = vmatpush1.xpose.msra.mxu0 %v684
        %726 = vmatprep.subr.mxu0 0.0
        %727 = vmatpush1.xpose.msra.mxu0 %v687
        %728 = vmatprep.subr.mxu0 0.0
        %729 = vmatpush1.xpose.msra.mxu0 %v690
        %730 = vmatprep.subr.mxu0 0.0
        %731 = vmatpush1.xpose.msra.mxu0 %v693
        %732 = vmatprep.subr.mxu0 0.0
        %733 = vmatpush1.xpose.msra.mxu0 %v696
        %734 = vmatprep.subr.mxu0 0.0
        %735 = vmatpush1.xpose.msra.mxu0 %v699
        %736 = vmatprep.subr.mxu0 0.0
        %737 = vmatpush1.xpose.msra.mxu0 %v702
        %738 = vmatprep.subr.mxu0 0.0
        %739 = vmatpush1.xpose.msra.mxu0 %v705
        %740 = vmatprep.subr.mxu0 0.0
        %741 = vmatpush1.xpose.msra.mxu0 %v708
        %742 = vmatprep.subr.mxu0 0.0
        %743 = vmatpush1.xpose.msra.mxu0 0.0
        %744 = vmatprep.subr.mxu0 0.0
        %745 = vmatpush1.xpose.msra.mxu0 0.0
        %746 = vmatprep.subr.mxu0 0.0
        %747 = vmatpush1.xpose.msra.mxu0 0.0
        %748 = vmatprep.subr.mxu0 0.0
        %749 = vmatpush1.xpose.msra.mxu0 0.0
        %750 = vmatprep.subr.mxu0 0.0
        %751 = vmatpush1.xpose.msra.mxu0 0.0
        %752 = vmatprep.subr.mxu0 0.0
        %753 = vmatpush1.xpose.msra.mxu0 0.0
        %754 = vmatprep.subr.mxu0 0.0
        %755 = vmatpush1.xpose.msra.mxu0 0.0
        %756 = vmatprep.subr.mxu0 0.0
        %757 = vmatpush1.xpose.msra.mxu0 0.0
        %758 = vmatprep.subr.mxu0 0.0
        %759 = vmatpush1.xpose.msra.mxu0 0.0
        %760 = vmatprep.subr.mxu0 0.0
        %761 = vmatpush1.xpose.msra.mxu0 0.0
        %762 = vmatprep.subr.mxu0 0.0
        %763 = vmatpush1.xpose.msra.mxu0 0.0
        %764 = vmatprep.subr.mxu0 0.0
        %765 = vmatpush1.xpose.msra.mxu0 0.0
        %766 = vmatprep.subr.mxu0 0.0
        %767 = vmatpush1.xpose.msra.mxu0 0.0
        %768 = vmatprep.subr.mxu0 0.0
        %769 = vmatpush1.xpose.msra.mxu0 0.0
        %770 = vmatprep.subr.mxu0 0.0
        %771 = vmatpush1.xpose.msra.mxu0 0.0
        %772 = vmatprep.subr.mxu0 0.0
        %773 = vmatpush1.xpose.msra.mxu0 0.0
        %774 = vmatprep.mubr.f32.mxu0 0.0
        %775 = vmatmul.mubr.f32.gmra.mrb[0].mxu0 %v660
        %v776 = vpop.f32.mrb[0].mxu0
        %v777 = vadd.f32 %v657, %v776
        %v778 = vpop.f32.mrb[0].mxu0
        %779 = vdwg.mxu0
        %v780 = vxor.u32 %v777, 2147483648
        %v781 = vmul.f32 %v780, 1.442695
        %v782 = vpow.pop %v781
        %v783 = vadd.f32 %v782, 1.0
        %v784 = vrcp.pop %v783
        %v785 = vmul.f32 1.0, %v784
        %786 = vst [vmem:[%s191] sm:$0x3] %v785
        %s787 = sand.u32 %s115, 1
        %s788 = scalar_lea.sflag [#allocation3], %s787
        %s789 = sand.u32 %s115, 1
        %s790 = smul.addr %s789, 2
        %s791 = scalar_lea.vmem [#allocation2], %s790
        // Predicated region
        $region37: #{tpu_custom_call.1} parent=35 // pred_check
          %p792 = pneg %p125
        $region38: #{tpu_custom_call.1} parent=35 // pred_check_branch
          %794 = sbr.rel (%p792) target = $region40
        $region39: #{tpu_custom_call.1} parent=35 // pred_region
          %s796 = ssub.s32 32, 32
          %797 = vsyncadd %s788, %s796
          %s798 = smul.addr %s18, 32
          %s799 = scalar_lea.hbm %s4, %s798
          %s801 = sshll.u32 %s791, 4
          %s802 = int_to_ptr.vmem [resolvable:$true] %s801
          %804 = dma.vmem_to_hbm [thread:$0]  %s802, 32, %s799, %s788
        $region40: #{tpu_custom_call.1} parent=35 // pred_fallthru
          _
      $region36: #{tpu_custom_call.1} parent=5 // pred_fallthru
        _
      %p805 = scmp.le.s32.totalorder 2, %s13
      // Predicated region
      $region41: #{tpu_custom_call.1} parent=5 // pred_check
        %p806 = pneg %p805
      $region42: #{tpu_custom_call.1} parent=5 // pred_check_branch
        %808 = sbr.rel (%p806) target = $region44
      $region43: #{tpu_custom_call.1} parent=5 // pred_region
        %s809 = ssub.s32 %s13, 2
        // Predicated region
        $region45: #{tpu_custom_call.1} parent=43 // pred_check
          %p810 = pneg %p131
        $region46: #{tpu_custom_call.1} parent=43 // pred_check_branch
          %812 = sbr.rel (%p810) target = $region48
        $region47: #{tpu_custom_call.1} parent=43 // pred_region
          %s813 = sand.u32 %s116, 1
          %s814 = scalar_lea.sflag [#allocation3], %s813
          %s815 = sand.u32 %s116, 1
          %s816 = smul.addr %s815, 2
          %s817 = scalar_lea.vmem [#allocation2], %s816
          %818 = dma.done %s814, 32
        $region48: #{tpu_custom_call.1} parent=43 // pred_fallthru
          _
      $region44: #{tpu_custom_call.1} parent=5 // pred_fallthru
        _
    $region6: #{tpu_custom_call.1} parent=1 // loop_footer
      %s17 = sadd.s32 1, %s13
    $region7: #{tpu_custom_call.1} parent=1 // loop_footer_branch
      %12 = sbr.rel target = $region3
    $region8: #{tpu_custom_call.1} parent=1 // loop_exit
      _
    %819 = vsyncpa [#allocation3], 1
    %s820 = scalar_lea.sflag [#allocation3], 1
    %821 = vsyncpa %s820, 1

</llo_original>
